<compile_context>
chip_gen: v7x
topology: tpu7x:2x2x1
jax: 0.10.0
libtpu: 0.0.40
codegen_flags: <defaults>
</compile_context>

<pallas_src>
import functools

import jax
import jax.numpy as jnp
from jax.experimental import pallas as pl
from jax.experimental.pallas import tpu as pltpu

LANE = 128     # lane width (last dim)
SUBLANE = 8    # f32 sublane height (second-to-last dim)


def _round_up(n, m):
    return ((n + m - 1) // m) * m


def charrnn_kernel(T, x_ref, h0_ref, wih_ref, whh_ref, b_ref, wfc_ref,
                   bfc_ref, out_ref, hn_ref, h_scratch):
    # Per grid step (one sequence of the batch):
    #   x_ref:   (TP, IP)  bf16    h0_ref:  (1, HP)  f32
    #   wih_ref: (IP, HP)  bf16    whh_ref: (HP, HP) bf16
    #   b_ref:   (1, HP)   f32     (b_ih + b_hh folded, zero in padded lanes)
    #   wfc_ref: (HP, OP)  bf16    bfc_ref: (1, OP)  f32
    #   out_ref: (TP, OP)  f32     hn_ref:  (1, HP)  f32
    #   h_scratch: (TP, HP) f32 VMEM scratch holding every h_t.
    h_scratch[...] = jnp.zeros_like(h_scratch)     # deterministic padded rows

    # Hoisted input projection + folded bias: one batched bf16 MXU matmul
    # (f32 accumulate) + one f32 add, fully off the sequential critical path.
    xw = jnp.dot(x_ref[...], wih_ref[...],
                 preferred_element_type=jnp.float32) + b_ref[...]   # (TP, HP)

    whh = whh_ref[...]                                               # bf16
    h = h0_ref[...]                                                  # (1, HP) f32

    # T is tiny and static -> fully unrolled. Critical path per step is one
    # bf16 (1,HP)@(HP,HP) matmul + f32 add + f32 tanh.
    # TODO(synk): switch to lax.fori_loop(..., unroll=k) with this scratch
    # accumulator if T grows past ~64 (vreg pressure / compile time).
    for t in range(T):
        h = jnp.tanh(xw[t:t + 1, :]
                     + jnp.dot(h.astype(jnp.bfloat16), whh,
                               preferred_element_type=jnp.float32))
        h_scratch[pl.ds(t, 1), :] = h       # off the recurrence dep chain

    # Deferred FC: one (TP,HP)@(HP,OP) bf16 matmul + one bias add, then a
    # single unmasked lane-dense (TP, OP) store.
    y = jnp.dot(h_scratch[...].astype(jnp.bfloat16), wfc_ref[...],
                preferred_element_type=jnp.float32) + bfc_ref[...]
    out_ref[...] = y.astype(out_ref.dtype)
    hn_ref[...] = h.astype(hn_ref.dtype)


def prepare_params(params):
    """One-time weight prep: transpose, cast matmul operands to bf16, fold the
    two RNN biases, and zero-pad everything to (8,128)-tile shapes.
    Padded rows/cols/lanes are exactly zero so padded hidden lanes stay 0."""
    H, I = params["w_ih"].shape
    O = params["w_fc"].shape[0]
    IP, HP, OP = _round_up(I, LANE), _round_up(H, LANE), _round_up(O, LANE)

    def pad2(a, shape):
        return jnp.zeros(shape, a.dtype).at[:a.shape[0], :a.shape[1]].set(a)

    return {
        "wih_t": pad2(params["w_ih"].T.astype(jnp.bfloat16), (IP, HP)),
        "whh_t": pad2(params["w_hh"].T.astype(jnp.bfloat16), (HP, HP)),
        "b":     pad2((params["b_ih"] + params["b_hh"])
                      .reshape(1, H).astype(jnp.float32), (1, HP)),
        "wfc_t": pad2(params["w_fc"].T.astype(jnp.bfloat16), (HP, OP)),
        "bfc":   pad2(params["b_fc"].reshape(1, O).astype(jnp.float32), (1, OP)),
    }


@functools.partial(jax.jit, static_argnames=("output_size",))
def char_rnn_forward(x, hidden, prep, *, output_size):
    """x: (B, T, I)  hidden: (1, B, H)  ->  (out (B, T, O), hidden (1, B, H))."""
    B, T, I = x.shape
    H = hidden.shape[-1]
    O = output_size
    IP, HP = prep["wih_t"].shape
    OP = prep["wfc_t"].shape[1]
    TP = _round_up(T, SUBLANE)

    # Per-call activation pad/cast (fused under jit).
    x_pad = (jnp.zeros((B, TP, IP), jnp.bfloat16)
             .at[:, :T, :I].set(x.astype(jnp.bfloat16)))
    h0_pad = (jnp.zeros((B, 1, HP), jnp.float32)
              .at[:, 0, :H].set(hidden[0].astype(jnp.float32)))

    ce = pl.CostEstimate(
        flops=2 * B * (TP * IP * HP + T * HP * HP + TP * HP * OP),
        transcendentals=B * T * HP,
        bytes_accessed=(2 * B * TP * IP + 4 * B * HP               # x, h0
                        + 2 * (IP * HP + HP * HP + HP * OP)        # bf16 weights
                        + 4 * (HP + OP)                            # f32 biases
                        + 4 * B * (TP * OP + HP)),                 # out, hn
    )

    out_pad, hn_pad = pl.pallas_call(
        functools.partial(charrnn_kernel, T),
        grid=(B,),
        out_shape=(jax.ShapeDtypeStruct((B, TP, OP), jnp.float32),
                   jax.ShapeDtypeStruct((B, 1, HP), jnp.float32)),
        in_specs=[
            pl.BlockSpec((None, TP, IP), lambda b: (b, 0, 0)),     # x
            pl.BlockSpec((None, 1, HP), lambda b: (b, 0, 0)),      # h0
            pl.BlockSpec((IP, HP), lambda b: (0, 0)),              # Wih^T
            pl.BlockSpec((HP, HP), lambda b: (0, 0)),              # Whh^T
            pl.BlockSpec((1, HP), lambda b: (0, 0)),               # b_ih+b_hh
            pl.BlockSpec((HP, OP), lambda b: (0, 0)),              # Wfc^T
            pl.BlockSpec((1, OP), lambda b: (0, 0)),               # b_fc
        ],
        out_specs=(
            pl.BlockSpec((None, TP, OP), lambda b: (b, 0, 0)),     # out
            pl.BlockSpec((None, 1, HP), lambda b: (b, 0, 0)),      # hn
        ),
        scratch_shapes=[pltpu.VMEM((TP, HP), jnp.float32)],
        input_output_aliases={1: 1},            # h0 buffer reused for hn
        compiler_params=pltpu.CompilerParams(
            dimension_semantics=("parallel",)),  # 2-TC sharding on v7x
        cost_estimate=ce,
    )(x_pad, h0_pad, prep["wih_t"], prep["whh_t"], prep["b"],
      prep["wfc_t"], prep["bfc"])

    out = out_pad[:, :T, :O]                    # slice off padded rows/lanes
    hn = hn_pad[:, 0, :H][None, :, :]           # (1, B, H), torch layout
    return out, hn


def char_rnn_reference(x, hidden, params):
    """Pure-JAX f32 reference matching torch.nn.RNN(tanh, batch_first)+Linear."""
    B, T, _ = x.shape
    h = hidden[0]                               # (B, H)
    outs = []
    for t in range(T):
        h = jnp.tanh(x[:, t, :] @ params["w_ih"].T + params["b_ih"]
                     + h @ params["w_hh"].T + params["b_hh"])
        outs.append(h @ params["w_fc"].T + params["b_fc"])
    return jnp.stack(outs, axis=1), h[None, :, :]


if __name__ == "__main__":
    input_size, hidden_size, output_size, seq_len, batch = 10, 20, 10, 5, 1

    key = jax.random.PRNGKey(0)
    kx, k1, k2, k3, k4, k5, k6 = jax.random.split(key, 7)

    # Deterministic PyTorch-style U(-1/sqrt(H), 1/sqrt(H)) init.
    bound = 1.0 / float(jnp.sqrt(jnp.float32(hidden_size)))
    params = {
        "w_ih": jax.random.uniform(k1, (hidden_size, input_size), jnp.float32, -bound, bound),
        "w_hh": jax.random.uniform(k2, (hidden_size, hidden_size), jnp.float32, -bound, bound),
        "b_ih": jax.random.uniform(k3, (hidden_size,), jnp.float32, -bound, bound),
        "b_hh": jax.random.uniform(k4, (hidden_size,), jnp.float32, -bound, bound),
        "w_fc": jax.random.uniform(k5, (output_size, hidden_size), jnp.float32, -bound, bound),
        "b_fc": jax.random.uniform(k6, (output_size,), jnp.float32, -bound, bound),
    }

    x = jax.random.normal(kx, (batch, seq_len, input_size), jnp.float32)
    hidden = jnp.zeros((1, batch, hidden_size), jnp.float32)

    prep = prepare_params(params)   # transpose / cast / fold / pad ONCE
    out, hn = jax.block_until_ready(
        char_rnn_forward(x, hidden, prep, output_size=output_size))
    out_ref, hn_ref = char_rnn_reference(x, hidden, params)

    assert out.shape == (batch, seq_len, output_size), out.shape
    assert hn.shape == (1, batch, hidden_size), hn.shape
    # bf16 MXU operands (f32 accumulate) -> loosened tolerance vs f32 reference.
    assert jnp.allclose(out, out_ref, atol=5e-2, rtol=5e-2), (
        "output mismatch, max|diff|=%f" % float(jnp.max(jnp.abs(out - out_ref))))
    assert jnp.allclose(hn, hn_ref, atol=5e-2, rtol=5e-2), (
        "hidden mismatch, max|diff|=%f" % float(jnp.max(jnp.abs(hn - hn_ref))))

    print("KERNEL_OK")
</pallas_src>

<mosaic_0001>
module attributes {stable_mosaic.version = 11 : i64} {
  func.func @charrnn_kernel(%arg0: i32, %arg1: memref<1x8x128xbf16, #tpu.memory_space<vmem>>, %arg2: memref<1x1x128xf32, #tpu.memory_space<vmem>>, %arg3: memref<128x128xbf16, #tpu.memory_space<vmem>>, %arg4: memref<128x128xbf16, #tpu.memory_space<vmem>>, %arg5: memref<1x128xf32, #tpu.memory_space<vmem>>, %arg6: memref<128x128xbf16, #tpu.memory_space<vmem>>, %arg7: memref<1x128xf32, #tpu.memory_space<vmem>>, %arg8: memref<1x8x128xf32, #tpu.memory_space<vmem>>, %arg9: memref<1x1x128xf32, #tpu.memory_space<vmem>>, %arg10: memref<8x128xf32, #tpu.memory_space<vmem>>) attributes {dimension_semantics = [#tpu.dimension_semantics<parallel>], iteration_bounds = array<i64: 1>, scalar_prefetch = 0 : i64, scratch_operands = 1 : i64, tpu.core_type = #tpu.core_type<tc>, window_params = [{transform_indices = @transform_0, window_bounds = array<i64: 1, 8, 128>}, {transform_indices = @transform_1, window_bounds = array<i64: 1, 1, 128>}, {pipeline_mode = #tpu.pipeline_mode<synchronous>, transform_indices = @transform_2, window_bounds = array<i64: 128, 128>}, {pipeline_mode = #tpu.pipeline_mode<synchronous>, transform_indices = @transform_3, window_bounds = array<i64: 128, 128>}, {pipeline_mode = #tpu.pipeline_mode<synchronous>, transform_indices = @transform_4, window_bounds = array<i64: 1, 128>}, {pipeline_mode = #tpu.pipeline_mode<synchronous>, transform_indices = @transform_5, window_bounds = array<i64: 128, 128>}, {pipeline_mode = #tpu.pipeline_mode<synchronous>, transform_indices = @transform_6, window_bounds = array<i64: 1, 128>}, {transform_indices = @transform_7, window_bounds = array<i64: 1, 8, 128>}, {transform_indices = @transform_8, window_bounds = array<i64: 1, 1, 128>}]} {
    %cst = arith.constant 0.000000e+00 : f32
    %0 = vector.broadcast %cst : f32 to vector<8x128xf32>
    %c0 = arith.constant 0 : index
    %c0_0 = arith.constant 0 : index
    %1 = vector.load %arg10[%c0, %c0_0] : memref<8x128xf32, #tpu.memory_space<vmem>>, vector<8x128xf32>
    tpu.vector_store %arg10[%c0, %c0_0], %0 {strides = array<i32>} : memref<8x128xf32, #tpu.memory_space<vmem>>, vector<8x128xf32>,
    %c0_1 = arith.constant 0 : index
    %c0_2 = arith.constant 0 : index
    %c0_3 = arith.constant 0 : index
    %2 = vector.load %arg1[%c0_1, %c0_2, %c0_3] : memref<1x8x128xbf16, #tpu.memory_space<vmem>>, vector<1x8x128xbf16>
    %3 = vector.shape_cast %2 : vector<1x8x128xbf16> to vector<8x128xbf16>
    %c0_4 = arith.constant 0 : index
    %c0_5 = arith.constant 0 : index
    %4 = vector.load %arg3[%c0_4, %c0_5] : memref<128x128xbf16, #tpu.memory_space<vmem>>, vector<128x128xbf16>
    %cst_6 = arith.constant dense<0.000000e+00> : vector<8x128xf32>
    %5 = tpu.matmul %3, %4, %cst_6 {dimension_numbers = #tpu.dot_dimension_numbers<[1], [0], [0], [1], [0, 0, 1, 1], [], []>} : vector<8x128xbf16>, vector<128x128xbf16>, vector<8x128xf32> -> vector<8x128xf32>
    %c0_7 = arith.constant 0 : index
    %c0_8 = arith.constant 0 : index
    %6 = vector.load %arg5[%c0_7, %c0_8] : memref<1x128xf32, #tpu.memory_space<vmem>>, vector<1x128xf32>
    %7 = vector.broadcast %6 : vector<1x128xf32> to vector<8x128xf32>
    %8 = arith.addf %5, %7 : vector<8x128xf32>
    %c0_9 = arith.constant 0 : index
    %c0_10 = arith.constant 0 : index
    %9 = vector.load %arg4[%c0_9, %c0_10] : memref<128x128xbf16, #tpu.memory_space<vmem>>, vector<128x128xbf16>
    %c0_11 = arith.constant 0 : index
    %c0_12 = arith.constant 0 : index
    %c0_13 = arith.constant 0 : index
    %10 = vector.load %arg2[%c0_11, %c0_12, %c0_13] : memref<1x1x128xf32, #tpu.memory_space<vmem>>, vector<1x1x128xf32>
    %11 = vector.shape_cast %10 : vector<1x1x128xf32> to vector<1x128xf32>
    %12 = vector.extract_strided_slice %8 {offsets = [0, 0], sizes = [1, 128], strides = [1, 1]} : vector<8x128xf32> to vector<1x128xf32>
    %13 = arith.truncf %11 : vector<1x128xf32> to vector<1x128xbf16>
    %cst_14 = arith.constant dense<0.000000e+00> : vector<1x128xf32>
    %14 = tpu.matmul %13, %9, %cst_14 {dimension_numbers = #tpu.dot_dimension_numbers<[1], [0], [0], [1], [0, 0, 1, 1], [], []>} : vector<1x128xbf16>, vector<128x128xbf16>, vector<1x128xf32> -> vector<1x128xf32>
    %15 = arith.addf %12, %14 : vector<1x128xf32>
    %16 = math.tanh %15 : vector<1x128xf32>
    %c0_15 = arith.constant 0 : index
    %c0_16 = arith.constant 0 : index
    %17 = vector.load %arg10[%c0_15, %c0_16] : memref<8x128xf32, #tpu.memory_space<vmem>>, vector<1x128xf32>
    tpu.vector_store %arg10[%c0_15, %c0_16], %16 {strides = array<i32>} : memref<8x128xf32, #tpu.memory_space<vmem>>, vector<1x128xf32>,
    %18 = vector.extract_strided_slice %8 {offsets = [1, 0], sizes = [1, 128], strides = [1, 1]} : vector<8x128xf32> to vector<1x128xf32>
    %19 = arith.truncf %16 : vector<1x128xf32> to vector<1x128xbf16>
    %cst_17 = arith.constant dense<0.000000e+00> : vector<1x128xf32>
    %20 = tpu.matmul %19, %9, %cst_17 {dimension_numbers = #tpu.dot_dimension_numbers<[1], [0], [0], [1], [0, 0, 1, 1], [], []>} : vector<1x128xbf16>, vector<128x128xbf16>, vector<1x128xf32> -> vector<1x128xf32>
    %21 = arith.addf %18, %20 : vector<1x128xf32>
    %22 = math.tanh %21 : vector<1x128xf32>
    %c1 = arith.constant 1 : index
    %c0_18 = arith.constant 0 : index
    %23 = vector.load %arg10[%c1, %c0_18] : memref<8x128xf32, #tpu.memory_space<vmem>>, vector<1x128xf32>
    tpu.vector_store %arg10[%c1, %c0_18], %22 {strides = array<i32>} : memref<8x128xf32, #tpu.memory_space<vmem>>, vector<1x128xf32>,
    %24 = vector.extract_strided_slice %8 {offsets = [2, 0], sizes = [1, 128], strides = [1, 1]} : vector<8x128xf32> to vector<1x128xf32>
    %25 = arith.truncf %22 : vector<1x128xf32> to vector<1x128xbf16>
    %cst_19 = arith.constant dense<0.000000e+00> : vector<1x128xf32>
    %26 = tpu.matmul %25, %9, %cst_19 {dimension_numbers = #tpu.dot_dimension_numbers<[1], [0], [0], [1], [0, 0, 1, 1], [], []>} : vector<1x128xbf16>, vector<128x128xbf16>, vector<1x128xf32> -> vector<1x128xf32>
    %27 = arith.addf %24, %26 : vector<1x128xf32>
    %28 = math.tanh %27 : vector<1x128xf32>
    %c2 = arith.constant 2 : index
    %c0_20 = arith.constant 0 : index
    %29 = vector.load %arg10[%c2, %c0_20] : memref<8x128xf32, #tpu.memory_space<vmem>>, vector<1x128xf32>
    tpu.vector_store %arg10[%c2, %c0_20], %28 {strides = array<i32>} : memref<8x128xf32, #tpu.memory_space<vmem>>, vector<1x128xf32>,
    %30 = vector.extract_strided_slice %8 {offsets = [3, 0], sizes = [1, 128], strides = [1, 1]} : vector<8x128xf32> to vector<1x128xf32>
    %31 = arith.truncf %28 : vector<1x128xf32> to vector<1x128xbf16>
    %cst_21 = arith.constant dense<0.000000e+00> : vector<1x128xf32>
    %32 = tpu.matmul %31, %9, %cst_21 {dimension_numbers = #tpu.dot_dimension_numbers<[1], [0], [0], [1], [0, 0, 1, 1], [], []>} : vector<1x128xbf16>, vector<128x128xbf16>, vector<1x128xf32> -> vector<1x128xf32>
    %33 = arith.addf %30, %32 : vector<1x128xf32>
    %34 = math.tanh %33 : vector<1x128xf32>
    %c3 = arith.constant 3 : index
    %c0_22 = arith.constant 0 : index
    %35 = vector.load %arg10[%c3, %c0_22] : memref<8x128xf32, #tpu.memory_space<vmem>>, vector<1x128xf32>
    tpu.vector_store %arg10[%c3, %c0_22], %34 {strides = array<i32>} : memref<8x128xf32, #tpu.memory_space<vmem>>, vector<1x128xf32>,
    %36 = vector.extract_strided_slice %8 {offsets = [4, 0], sizes = [1, 128], strides = [1, 1]} : vector<8x128xf32> to vector<1x128xf32>
    %37 = arith.truncf %34 : vector<1x128xf32> to vector<1x128xbf16>
    %cst_23 = arith.constant dense<0.000000e+00> : vector<1x128xf32>
    %38 = tpu.matmul %37, %9, %cst_23 {dimension_numbers = #tpu.dot_dimension_numbers<[1], [0], [0], [1], [0, 0, 1, 1], [], []>} : vector<1x128xbf16>, vector<128x128xbf16>, vector<1x128xf32> -> vector<1x128xf32>
    %39 = arith.addf %36, %38 : vector<1x128xf32>
    %40 = math.tanh %39 : vector<1x128xf32>
    %c4 = arith.constant 4 : index
    %c0_24 = arith.constant 0 : index
    %41 = vector.load %arg10[%c4, %c0_24] : memref<8x128xf32, #tpu.memory_space<vmem>>, vector<1x128xf32>
    tpu.vector_store %arg10[%c4, %c0_24], %40 {strides = array<i32>} : memref<8x128xf32, #tpu.memory_space<vmem>>, vector<1x128xf32>,
    %c0_25 = arith.constant 0 : index
    %c0_26 = arith.constant 0 : index
    %42 = vector.load %arg10[%c0_25, %c0_26] : memref<8x128xf32, #tpu.memory_space<vmem>>, vector<8x128xf32>
    %43 = arith.truncf %42 : vector<8x128xf32> to vector<8x128xbf16>
    %c0_27 = arith.constant 0 : index
    %c0_28 = arith.constant 0 : index
    %44 = vector.load %arg6[%c0_27, %c0_28] : memref<128x128xbf16, #tpu.memory_space<vmem>>, vector<128x128xbf16>
    %cst_29 = arith.constant dense<0.000000e+00> : vector<8x128xf32>
    %45 = tpu.matmul %43, %44, %cst_29 {dimension_numbers = #tpu.dot_dimension_numbers<[1], [0], [0], [1], [0, 0, 1, 1], [], []>} : vector<8x128xbf16>, vector<128x128xbf16>, vector<8x128xf32> -> vector<8x128xf32>
    %c0_30 = arith.constant 0 : index
    %c0_31 = arith.constant 0 : index
    %46 = vector.load %arg7[%c0_30, %c0_31] : memref<1x128xf32, #tpu.memory_space<vmem>>, vector<1x128xf32>
    %47 = vector.broadcast %46 : vector<1x128xf32> to vector<8x128xf32>
    %48 = arith.addf %45, %47 : vector<8x128xf32>
    %c0_32 = arith.constant 0 : index
    %c0_33 = arith.constant 0 : index
    %c0_34 = arith.constant 0 : index
    %49 = vector.load %arg8[%c0_32, %c0_33, %c0_34] : memref<1x8x128xf32, #tpu.memory_space<vmem>>, vector<1x8x128xf32>
    %50 = vector.shape_cast %49 : vector<1x8x128xf32> to vector<8x128xf32>
    %51 = vector.shape_cast %48 : vector<8x128xf32> to vector<1x8x128xf32>
    tpu.vector_store %arg8[%c0_32, %c0_33, %c0_34], %51 {strides = array<i32>} : memref<1x8x128xf32, #tpu.memory_space<vmem>>, vector<1x8x128xf32>,
    %c0_35 = arith.constant 0 : index
    %c0_36 = arith.constant 0 : index
    %c0_37 = arith.constant 0 : index
    %52 = vector.load %arg9[%c0_35, %c0_36, %c0_37] : memref<1x1x128xf32, #tpu.memory_space<vmem>>, vector<1x1x128xf32>
    %53 = vector.shape_cast %52 : vector<1x1x128xf32> to vector<1x128xf32>
    %54 = vector.shape_cast %40 : vector<1x128xf32> to vector<1x1x128xf32>
    tpu.vector_store %arg9[%c0_35, %c0_36, %c0_37], %54 {strides = array<i32>} : memref<1x1x128xf32, #tpu.memory_space<vmem>>, vector<1x1x128xf32>,
    return
  }
  func.func @transform_0(%arg0: i32) -> (i32, i32, i32) {
    %c0_i32 = arith.constant 0 : i32
    %c0_i32_0 = arith.constant 0 : i32
    %c0_i32_1 = arith.constant 0 : i32
    return %arg0, %c0_i32, %c0_i32_0 : i32, i32, i32
  }
  func.func @transform_1(%arg0: i32) -> (i32, i32, i32) {
    %c0_i32 = arith.constant 0 : i32
    %c0_i32_0 = arith.constant 0 : i32
    %c0_i32_1 = arith.constant 0 : i32
    return %arg0, %c0_i32, %c0_i32_0 : i32, i32, i32
  }
  func.func @transform_2(%arg0: i32) -> (i32, i32) {
    %c0_i32 = arith.constant 0 : i32
    %c0_i32_0 = arith.constant 0 : i32
    %c0_i32_1 = arith.constant 0 : i32
    return %c0_i32, %c0_i32_0 : i32, i32
  }
  func.func @transform_3(%arg0: i32) -> (i32, i32) {
    %c0_i32 = arith.constant 0 : i32
    %c0_i32_0 = arith.constant 0 : i32
    %c0_i32_1 = arith.constant 0 : i32
    return %c0_i32, %c0_i32_0 : i32, i32
  }
  func.func @transform_4(%arg0: i32) -> (i32, i32) {
    %c0_i32 = arith.constant 0 : i32
    %c0_i32_0 = arith.constant 0 : i32
    %c0_i32_1 = arith.constant 0 : i32
    return %c0_i32, %c0_i32_0 : i32, i32
  }
  func.func @transform_5(%arg0: i32) -> (i32, i32) {
    %c0_i32 = arith.constant 0 : i32
    %c0_i32_0 = arith.constant 0 : i32
    %c0_i32_1 = arith.constant 0 : i32
    return %c0_i32, %c0_i32_0 : i32, i32
  }
  func.func @transform_6(%arg0: i32) -> (i32, i32) {
    %c0_i32 = arith.constant 0 : i32
    %c0_i32_0 = arith.constant 0 : i32
    %c0_i32_1 = arith.constant 0 : i32
    return %c0_i32, %c0_i32_0 : i32, i32
  }
  func.func @transform_7(%arg0: i32) -> (i32, i32, i32) {
    %c0_i32 = arith.constant 0 : i32
    %c0_i32_0 = arith.constant 0 : i32
    %c0_i32_1 = arith.constant 0 : i32
    return %arg0, %c0_i32, %c0_i32_0 : i32, i32, i32
  }
  func.func @transform_8(%arg0: i32) -> (i32, i32, i32) {
    %c0_i32 = arith.constant 0 : i32
    %c0_i32_0 = arith.constant 0 : i32
    %c0_i32_1 = arith.constant 0 : i32
    return %arg0, %c0_i32, %c0_i32_0 : i32, i32, i32
  }
}

</mosaic_0001>

<llo_original>
// kernel: char_rnn_forward.1
$region0: #{char_rnn_forward.1}
  #allocation0 [shape = 'u32[]', space=smem, size = 0x4, offset = 0x4, fixed_abs, tag = 'smem constant byte address 0x4 - core index']
  #allocation1 [shape = 'u32[144,128]{1,0:T(1,128)}', space=vmem, size = 0x12000, scoped, tag = 'internal scratch']
  #allocation2 [shape = 'f32[8,128]{1,0:T(8,128)}', space=vmem, size = 0x1000, scoped, tag = 'scratch operand']
  %s0 = inlined_call_operand.vmem [shape: bf16[1,8,128], index: 0, kind: input, shape index: {}]
  %s1 = inlined_call_operand.vmem [shape: f32[1,1,128], index: 1, kind: input, shape index: {}, may-alias: {1,8}]
  %s2 = inlined_call_operand.hbm [shape: bf16[128,128], index: 2, kind: input, shape index: {}]
  %s3 = inlined_call_operand.hbm [shape: bf16[128,128], index: 3, kind: input, shape index: {}]
  %s4 = inlined_call_operand.vmem [shape: f32[1,128], index: 4, kind: input, shape index: {}]
  %s5 = inlined_call_operand.hbm [shape: bf16[128,128], index: 5, kind: input, shape index: {}]
  %s6 = inlined_call_operand.vmem [shape: f32[1,128], index: 6, kind: input, shape index: {}]
  %s7 = inlined_call_operand.vmem [shape: f32[1,8,128], index: 7, kind: output, shape index: {0}]
  %s8 = inlined_call_operand.vmem [shape: f32[1,1,128], index: 8, kind: output, shape index: {1}, may-alias: {1,8}]
  %9 = xla_tuple %s7, %s8
  %s10 = sld [smem:[#allocation0]]
  $region58: #{char_rnn_forward.1} parent=0
    _
  %s12 = ssub.s32 1, %s10
  %s13 = scalar_select 0, %s12, %s10
  $region1: #{char_rnn_forward.1} parent=0
    #allocation3 [shape = 'u8[32768]{0}', space=vmem, size = 0x8000, scoped, tag = 'input window, operand 2, single buffered']
    #allocation4 [shape = 's32[1]{0}', space=sflag, size = 0x4, scoped, tag = 'scoped memory for char_rnn_forward.1']
    #allocation5 [shape = 'u8[32768]{0}', space=vmem, size = 0x8000, scoped, tag = 'input window, operand 3, single buffered']
    #allocation6 [shape = 's32[1]{0}', space=sflag, size = 0x4, scoped, tag = 'scoped memory for char_rnn_forward.1']
    #allocation7 [shape = 'u8[32768]{0}', space=vmem, size = 0x8000, scoped, tag = 'input window, operand 5, single buffered']
    %14 = vsyncpa [#allocation4], 0
    %15 = vsyncpa [#allocation6], 0
    // Predicated region
    $region2: #{char_rnn_forward.1} parent=1 // pred_check
      _
    $region3: #{char_rnn_forward.1} parent=1 // pred_check_branch
      %17 = sbr.rel (0) target = $region5
    $region4: #{char_rnn_forward.1} parent=1 // pred_region
      _
    $region5: #{char_rnn_forward.1} parent=1 // pred_fallthru
      _
    // Predicated region
    $region6: #{char_rnn_forward.1} parent=1 // pred_check
      _
    $region7: #{char_rnn_forward.1} parent=1 // pred_check_branch
      %19 = sbr.rel (0) target = $region9
    $region8: #{char_rnn_forward.1} parent=1 // pred_region
      _
    $region9: #{char_rnn_forward.1} parent=1 // pred_fallthru
      _
    // Predicated region
    $region10: #{char_rnn_forward.1} parent=1 // pred_check
      _
    $region11: #{char_rnn_forward.1} parent=1 // pred_check_branch
      %21 = sbr.rel (0) target = $region13
    $region12: #{char_rnn_forward.1} parent=1 // pred_region
      %s23 = ssub.s32 1024, 1024
      %24 = vsyncadd [#allocation4], %s23
      %s25 = sshll.u32 [#allocation3], 4
      %s26 = int_to_ptr.vmem [resolvable:$true] %s25
      %31 = dma.hbm_to_vmem [thread:$0]  %s2, 1024, %s26, [#allocation4], 64, 64, 4
    $region13: #{char_rnn_forward.1} parent=1 // pred_fallthru
      _
    // Predicated region
    $region14: #{char_rnn_forward.1} parent=1 // pred_check
      _
    $region15: #{char_rnn_forward.1} parent=1 // pred_check_branch
      %33 = sbr.rel (0) target = $region17
    $region16: #{char_rnn_forward.1} parent=1 // pred_region
      %s35 = ssub.s32 1024, 1024
      %36 = vsyncadd [#allocation6], %s35
      %s37 = sshll.u32 [#allocation5], 4
      %s38 = int_to_ptr.vmem [resolvable:$true] %s37
      %43 = dma.hbm_to_vmem [thread:$0]  %s3, 1024, %s38, [#allocation6], 64, 64, 4
    $region17: #{char_rnn_forward.1} parent=1 // pred_fallthru
      _
    // Predicated region
    $region18: #{char_rnn_forward.1} parent=1 // pred_check
      _
    $region19: #{char_rnn_forward.1} parent=1 // pred_check_branch
      %45 = sbr.rel (0) target = $region21
    $region20: #{char_rnn_forward.1} parent=1 // pred_region
      _
    $region21: #{char_rnn_forward.1} parent=1 // pred_fallthru
      _
    // Predicated region
    $region22: #{char_rnn_forward.1} parent=1 // pred_check
      _
    $region23: #{char_rnn_forward.1} parent=1 // pred_check_branch
      %47 = sbr.rel (0) target = $region25
    $region24: #{char_rnn_forward.1} parent=1 // pred_region
      %s49 = ssub.s32 1024, 1024
      %50 = vsyncadd [#allocation6], %s49
      %s51 = sshll.u32 [#allocation7], 4
      %s52 = int_to_ptr.vmem [resolvable:$true] %s51
      %57 = dma.hbm_to_vmem [thread:$0]  %s5, 1024, %s52, [#allocation6], 64, 64, 4
    $region25: #{char_rnn_forward.1} parent=1 // pred_fallthru
      _
    // Predicated region
    $region26: #{char_rnn_forward.1} parent=1 // pred_check
      _
    $region27: #{char_rnn_forward.1} parent=1 // pred_check_branch
      %59 = sbr.rel (0) target = $region29
    $region28: #{char_rnn_forward.1} parent=1 // pred_region
      _
    $region29: #{char_rnn_forward.1} parent=1 // pred_fallthru
      _
    // Predicated region
    $region30: #{char_rnn_forward.1} parent=1 // pred_check
      _
    $region31: #{char_rnn_forward.1} parent=1 // pred_check_branch
      %61 = sbr.rel (0) target = $region33
    $region32: #{char_rnn_forward.1} parent=1 // pred_region
      %62 = dma.done [#allocation4], 1024
    $region33: #{char_rnn_forward.1} parent=1 // pred_fallthru
      _
    // Predicated region
    $region34: #{char_rnn_forward.1} parent=1 // pred_check
      _
    $region35: #{char_rnn_forward.1} parent=1 // pred_check_branch
      %64 = sbr.rel (0) target = $region37
    $region36: #{char_rnn_forward.1} parent=1 // pred_region
      %65 = dma.done [#allocation6], 1024
    $region37: #{char_rnn_forward.1} parent=1 // pred_fallthru
      _
    // Predicated region
    $region38: #{char_rnn_forward.1} parent=1 // pred_check
      _
    $region39: #{char_rnn_forward.1} parent=1 // pred_check_branch
      %67 = sbr.rel (0) target = $region41
    $region40: #{char_rnn_forward.1} parent=1 // pred_region
      %68 = dma.done [#allocation6], 1024
    $region41: #{char_rnn_forward.1} parent=1 // pred_fallthru
      _
    %70 = vst [vmem:[#allocation2] sm:$0xff] 0.0
    %v71 = vld [vmem:[%s0] sm:$0xf]
    %v72 = vld [vmem:[#allocation3] sm:$0xf]
    %v73 = vld [vmem:[#allocation3 + $0x4] sm:$0xf]
    %v74 = vld [vmem:[#allocation3 + $0x8] sm:$0xf]
    %v75 = vld [vmem:[#allocation3 + $0xc] sm:$0xf]
    %v76 = vld [vmem:[#allocation3 + $0x10] sm:$0xf]
    %v77 = vld [vmem:[#allocation3 + $0x14] sm:$0xf]
    %v78 = vld [vmem:[#allocation3 + $0x18] sm:$0xf]
    %v79 = vld [vmem:[#allocation3 + $0x1c] sm:$0xf]
    %v80 = vld [vmem:[#allocation3 + $0x20] sm:$0xf]
    %v81 = vld [vmem:[#allocation3 + $0x24] sm:$0xf]
    %v82 = vld [vmem:[#allocation3 + $0x28] sm:$0xf]
    %v83 = vld [vmem:[#allocation3 + $0x2c] sm:$0xf]
    %v84 = vld [vmem:[#allocation3 + $0x30] sm:$0xf]
    %v85 = vld [vmem:[#allocation3 + $0x34] sm:$0xf]
    %v86 = vld [vmem:[#allocation3 + $0x38] sm:$0xf]
    %v87 = vld [vmem:[#allocation3 + $0x3c] sm:$0xf]
    %v88 = vld [vmem:[%s4] sm:$0x1]
    %v90 = vlaneseq
    %v91 = vshrl.u32 %v90, 7
    %v92 = vsub.s32 0, %v91
    %v93 = vrot.slane %v88, %v92
    %v111 = vunpack.c.l.b16 %v72
    %v112 = vunpack.c.l.b16 %v73
    %v113 = vunpack.c.l.b16 %v74
    %v114 = vunpack.c.l.b16 %v75
    %v115 = vunpack.c.l.b16 %v76
    %v116 = vunpack.c.l.b16 %v77
    %v117 = vunpack.c.l.b16 %v78
    %v118 = vunpack.c.l.b16 %v79
    %v119 = vunpack.c.l.b16 %v80
    %v120 = vunpack.c.l.b16 %v81
    %v121 = vunpack.c.l.b16 %v82
    %v122 = vunpack.c.l.b16 %v83
    %v123 = vunpack.c.l.b16 %v84
    %v124 = vunpack.c.l.b16 %v85
    %v125 = vunpack.c.l.b16 %v86
    %v126 = vunpack.c.l.b16 %v87
    %v127 = vpack.c.b16 %v112, %v111
    %v128 = vpack.c.b16 %v114, %v113
    %v129 = vpack.c.b16 %v116, %v115
    %v130 = vpack.c.b16 %v118, %v117
    %v131 = vpack.c.b16 %v120, %v119
    %v132 = vpack.c.b16 %v122, %v121
    %v133 = vpack.c.b16 %v124, %v123
    %v134 = vpack.c.b16 %v126, %v125
    %143 = vmatprep.subr.bf16.mxu0 0
    %144 = vmatpush1.bf16.msra.mxu0 %v127
    %145 = vmatprep.subr.bf16.mxu0 0
    %146 = vmatpush1.bf16.msra.mxu0 %v128
    %147 = vmatprep.subr.bf16.mxu0 0
    %148 = vmatpush1.bf16.msra.mxu0 %v129
    %149 = vmatprep.subr.bf16.mxu0 0
    %150 = vmatpush1.bf16.msra.mxu0 %v130
    %151 = vmatprep.subr.bf16.mxu0 0
    %152 = vmatpush1.bf16.msra.mxu0 %v131
    %153 = vmatprep.subr.bf16.mxu0 0
    %154 = vmatpush1.bf16.msra.mxu0 %v132
    %155 = vmatprep.subr.bf16.mxu0 0
    %156 = vmatpush1.bf16.msra.mxu0 %v133
    %157 = vmatprep.subr.bf16.mxu0 0
    %158 = vmatpush1.bf16.msra.mxu0 %v134
    %159 = vmatprep.subr.bf16.mxu0 0
    %160 = vmatpush1.bf16.msra.mxu0 0
    %161 = vmatprep.subr.bf16.mxu0 0
    %162 = vmatpush1.bf16.msra.mxu0 0
    %163 = vmatprep.subr.bf16.mxu0 0
    %164 = vmatpush1.bf16.msra.mxu0 0
    %165 = vmatprep.subr.bf16.mxu0 0
    %166 = vmatpush1.bf16.msra.mxu0 0
    %167 = vmatprep.subr.bf16.mxu0 0
    %168 = vmatpush1.bf16.msra.mxu0 0
    %169 = vmatprep.subr.bf16.mxu0 0
    %170 = vmatpush1.bf16.msra.mxu0 0
    %171 = vmatprep.subr.bf16.mxu0 0
    %172 = vmatpush1.bf16.msra.mxu0 0
    %173 = vmatprep.subr.bf16.mxu0 0
    %174 = vmatpush1.bf16.msra.mxu0 0
    %175 = vmatprep.mubr.bf16.mxu0 0
    %176 = vmatmul.mubr.bf16.gmra.mrb[0].mxu0 %v71
    %v177 = vpop.f32.mrb[0].mxu0
    %v178 = vadd.f32 %v93, %v177
    %v179 = vpop.f32.mrb[0].mxu0
    %v180 = vpop.f32.mrb[0].mxu0
    %v181 = vpop.f32.mrb[0].mxu0
    %182 = vdwg.mxu0
    %v183 = vld [vmem:[#allocation5] sm:$0xf]
    %v184 = vld [vmem:[#allocation5 + $0x4] sm:$0xf]
    %v185 = vld [vmem:[#allocation5 + $0x8] sm:$0xf]
    %v186 = vld [vmem:[#allocation5 + $0xc] sm:$0xf]
    %v187 = vld [vmem:[#allocation5 + $0x10] sm:$0xf]
    %v188 = vld [vmem:[#allocation5 + $0x14] sm:$0xf]
    %v189 = vld [vmem:[#allocation5 + $0x18] sm:$0xf]
    %v190 = vld [vmem:[#allocation5 + $0x1c] sm:$0xf]
    %v191 = vld [vmem:[#allocation5 + $0x20] sm:$0xf]
    %v192 = vld [vmem:[#allocation5 + $0x24] sm:$0xf]
    %v193 = vld [vmem:[#allocation5 + $0x28] sm:$0xf]
    %v194 = vld [vmem:[#allocation5 + $0x2c] sm:$0xf]
    %v195 = vld [vmem:[#allocation5 + $0x30] sm:$0xf]
    %v196 = vld [vmem:[#allocation5 + $0x34] sm:$0xf]
    %v197 = vld [vmem:[#allocation5 + $0x38] sm:$0xf]
    %v198 = vld [vmem:[#allocation5 + $0x3c] sm:$0xf]
    %v199 = vld [vmem:[%s1] sm:$0x1]
    %v200 = vpack.c.bf16 %v199, %v199
    %v217 = vunpack.c.l.b16 %v183
    %v218 = vunpack.c.l.b16 %v184
    %v219 = vunpack.c.l.b16 %v185
    %v220 = vunpack.c.l.b16 %v186
    %v221 = vunpack.c.l.b16 %v187
    %v222 = vunpack.c.l.b16 %v188
    %v223 = vunpack.c.l.b16 %v189
    %v224 = vunpack.c.l.b16 %v190
    %v225 = vunpack.c.l.b16 %v191
    %v226 = vunpack.c.l.b16 %v192
    %v227 = vunpack.c.l.b16 %v193
    %v228 = vunpack.c.l.b16 %v194
    %v229 = vunpack.c.l.b16 %v195
    %v230 = vunpack.c.l.b16 %v196
    %v231 = vunpack.c.l.b16 %v197
    %v232 = vunpack.c.l.b16 %v198
    %v233 = vpack.c.b16 %v218, %v217
    %v234 = vpack.c.b16 %v220, %v219
    %v235 = vpack.c.b16 %v222, %v221
    %v236 = vpack.c.b16 %v224, %v223
    %v237 = vpack.c.b16 %v226, %v225
    %v238 = vpack.c.b16 %v228, %v227
    %v239 = vpack.c.b16 %v230, %v229
    %v240 = vpack.c.b16 %v232, %v231
    %249 = vmatprep.subr.bf16.mxu0 0
    %250 = vmatpush1.bf16.msra.mxu0 %v233
    %251 = vmatprep.subr.bf16.mxu0 0
    %252 = vmatpush1.bf16.msra.mxu0 %v234
    %253 = vmatprep.subr.bf16.mxu0 0
    %254 = vmatpush1.bf16.msra.mxu0 %v235
    %255 = vmatprep.subr.bf16.mxu0 0
    %256 = vmatpush1.bf16.msra.mxu0 %v236
    %257 = vmatprep.subr.bf16.mxu0 0
    %258 = vmatpush1.bf16.msra.mxu0 %v237
    %259 = vmatprep.subr.bf16.mxu0 0
    %260 = vmatpush1.bf16.msra.mxu0 %v238
    %261 = vmatprep.subr.bf16.mxu0 0
    %262 = vmatpush1.bf16.msra.mxu0 %v239
    %263 = vmatprep.subr.bf16.mxu0 0
    %264 = vmatpush1.bf16.msra.mxu0 %v240
    %265 = vmatprep.subr.bf16.mxu0 0
    %266 = vmatpush1.bf16.msra.mxu0 0
    %267 = vmatprep.subr.bf16.mxu0 0
    %268 = vmatpush1.bf16.msra.mxu0 0
    %269 = vmatprep.subr.bf16.mxu0 0
    %270 = vmatpush1.bf16.msra.mxu0 0
    %271 = vmatprep.subr.bf16.mxu0 0
    %272 = vmatpush1.bf16.msra.mxu0 0
    %273 = vmatprep.subr.bf16.mxu0 0
    %274 = vmatpush1.bf16.msra.mxu0 0
    %275 = vmatprep.subr.bf16.mxu0 0
    %276 = vmatpush1.bf16.msra.mxu0 0
    %277 = vmatprep.subr.bf16.mxu0 0
    %278 = vmatpush1.bf16.msra.mxu0 0
    %279 = vmatprep.subr.bf16.mxu0 0
    %280 = vmatpush1.bf16.msra.mxu0 0
    %281 = vmatprep.mubr.bf16.mxu0 0
    %282 = vmatmul.mubr.bf16.gmra.mrb[0].mxu0 %v200
    %v283 = vpop.f32.mrb[0].mxu0
    %v284 = vadd.f32 0.0, %v283
    %v285 = vpop.f32.mrb[0].mxu0
    %v286 = vpop.f32.mrb[0].mxu0
    %v287 = vpop.f32.mrb[0].mxu0
    %288 = vdwg.mxu0
    %v289 = vadd.f32 %v178, %v284
    %v290 = vtanh.pop %v289
    %291 = vst [vmem:[#allocation2] sm:$0x1] %v290
    %v292 = vpack.c.bf16 %v290, %v290
    %293 = vmatprep.subr.bf16.mxu0 0
    %294 = vmatpush1.bf16.msra.mxu0 %v233
    %295 = vmatprep.subr.bf16.mxu0 0
    %296 = vmatpush1.bf16.msra.mxu0 %v234
    %297 = vmatprep.subr.bf16.mxu0 0
    %298 = vmatpush1.bf16.msra.mxu0 %v235
    %299 = vmatprep.subr.bf16.mxu0 0
    %300 = vmatpush1.bf16.msra.mxu0 %v236
    %301 = vmatprep.subr.bf16.mxu0 0
    %302 = vmatpush1.bf16.msra.mxu0 %v237
    %303 = vmatprep.subr.bf16.mxu0 0
    %304 = vmatpush1.bf16.msra.mxu0 %v238
    %305 = vmatprep.subr.bf16.mxu0 0
    %306 = vmatpush1.bf16.msra.mxu0 %v239
    %307 = vmatprep.subr.bf16.mxu0 0
    %308 = vmatpush1.bf16.msra.mxu0 %v240
    %309 = vmatprep.subr.bf16.mxu0 0
    %310 = vmatpush1.bf16.msra.mxu0 0
    %311 = vmatprep.subr.bf16.mxu0 0
    %312 = vmatpush1.bf16.msra.mxu0 0
    %313 = vmatprep.subr.bf16.mxu0 0
    %314 = vmatpush1.bf16.msra.mxu0 0
    %315 = vmatprep.subr.bf16.mxu0 0
    %316 = vmatpush1.bf16.msra.mxu0 0
    %317 = vmatprep.subr.bf16.mxu0 0
    %318 = vmatpush1.bf16.msra.mxu0 0
    %319 = vmatprep.subr.bf16.mxu0 0
    %320 = vmatpush1.bf16.msra.mxu0 0
    %321 = vmatprep.subr.bf16.mxu0 0
    %322 = vmatpush1.bf16.msra.mxu0 0
    %323 = vmatprep.subr.bf16.mxu0 0
    %324 = vmatpush1.bf16.msra.mxu0 0
    %325 = vmatprep.mubr.bf16.mxu0 0
    %326 = vmatmul.mubr.bf16.gmra.mrb[0].mxu0 %v292
    %v327 = vpop.f32.mrb[0].mxu0
    %v328 = vadd.f32 0.0, %v327
    %v329 = vpop.f32.mrb[0].mxu0
    %v330 = vpop.f32.mrb[0].mxu0
    %v331 = vpop.f32.mrb[0].mxu0
    %332 = vdwg.mxu0
    %v334 = vrot.slane %v328, 7
    %v336 = vadd.f32 %v178, %v334
    %v337 = vtanh.pop %v336
    %338 = vst [vmem:[#allocation2] sm:$0x2] %v337
    %v339 = vpack.c.bf16 %v337, %v337
    %v341 = vshrl.u32 %v339, 16
    %344 = vmatprep.subr.bf16.mxu0 0
    %345 = vmatpush1.bf16.msra.mxu0 %v233
    %346 = vmatprep.subr.bf16.mxu0 0
    %347 = vmatpush1.bf16.msra.mxu0 %v234
    %348 = vmatprep.subr.bf16.mxu0 0
    %349 = vmatpush1.bf16.msra.mxu0 %v235
    %350 = vmatprep.subr.bf16.mxu0 0
    %351 = vmatpush1.bf16.msra.mxu0 %v236
    %352 = vmatprep.subr.bf16.mxu0 0
    %353 = vmatpush1.bf16.msra.mxu0 %v237
    %354 = vmatprep.subr.bf16.mxu0 0
    %355 = vmatpush1.bf16.msra.mxu0 %v238
    %356 = vmatprep.subr.bf16.mxu0 0
    %357 = vmatpush1.bf16.msra.mxu0 %v239
    %358 = vmatprep.subr.bf16.mxu0 0
    %359 = vmatpush1.bf16.msra.mxu0 %v240
    %360 = vmatprep.subr.bf16.mxu0 0
    %361 = vmatpush1.bf16.msra.mxu0 0
    %362 = vmatprep.subr.bf16.mxu0 0
    %363 = vmatpush1.bf16.msra.mxu0 0
    %364 = vmatprep.subr.bf16.mxu0 0
    %365 = vmatpush1.bf16.msra.mxu0 0
    %366 = vmatprep.subr.bf16.mxu0 0
    %367 = vmatpush1.bf16.msra.mxu0 0
    %368 = vmatprep.subr.bf16.mxu0 0
    %369 = vmatpush1.bf16.msra.mxu0 0
    %370 = vmatprep.subr.bf16.mxu0 0
    %371 = vmatpush1.bf16.msra.mxu0 0
    %372 = vmatprep.subr.bf16.mxu0 0
    %373 = vmatpush1.bf16.msra.mxu0 0
    %374 = vmatprep.subr.bf16.mxu0 0
    %375 = vmatpush1.bf16.msra.mxu0 0
    %376 = vmatprep.mubr.bf16.mxu0 0
    %377 = vmatmul.mubr.bf16.gmra.mrb[0].mxu0 %v341
    %v378 = vpop.f32.mrb[0].mxu0
    %v379 = vadd.f32 0.0, %v378
    %v380 = vpop.f32.mrb[0].mxu0
    %v381 = vpop.f32.mrb[0].mxu0
    %v382 = vpop.f32.mrb[0].mxu0
    %383 = vdwg.mxu0
    %v385 = vrot.slane %v379, 6
    %v387 = vadd.f32 %v178, %v385
    %v388 = vtanh.pop %v387
    %389 = vst [vmem:[#allocation2] sm:$0x4] %v388
    %v390 = vpack.c.bf16 %v388, %v388
    %v392 = vrot.slane %v390, 1
    %394 = vmatprep.subr.bf16.mxu0 0
    %395 = vmatpush1.bf16.msra.mxu0 %v233
    %396 = vmatprep.subr.bf16.mxu0 0
    %397 = vmatpush1.bf16.msra.mxu0 %v234
    %398 = vmatprep.subr.bf16.mxu0 0
    %399 = vmatpush1.bf16.msra.mxu0 %v235
    %400 = vmatprep.subr.bf16.mxu0 0
    %401 = vmatpush1.bf16.msra.mxu0 %v236
    %402 = vmatprep.subr.bf16.mxu0 0
    %403 = vmatpush1.bf16.msra.mxu0 %v237
    %404 = vmatprep.subr.bf16.mxu0 0
    %405 = vmatpush1.bf16.msra.mxu0 %v238
    %406 = vmatprep.subr.bf16.mxu0 0
    %407 = vmatpush1.bf16.msra.mxu0 %v239
    %408 = vmatprep.subr.bf16.mxu0 0
    %409 = vmatpush1.bf16.msra.mxu0 %v240
    %410 = vmatprep.subr.bf16.mxu0 0
    %411 = vmatpush1.bf16.msra.mxu0 0
    %412 = vmatprep.subr.bf16.mxu0 0
    %413 = vmatpush1.bf16.msra.mxu0 0
    %414 = vmatprep.subr.bf16.mxu0 0
    %415 = vmatpush1.bf16.msra.mxu0 0
    %416 = vmatprep.subr.bf16.mxu0 0
    %417 = vmatpush1.bf16.msra.mxu0 0
    %418 = vmatprep.subr.bf16.mxu0 0
    %419 = vmatpush1.bf16.msra.mxu0 0
    %420 = vmatprep.subr.bf16.mxu0 0
    %421 = vmatpush1.bf16.msra.mxu0 0
    %422 = vmatprep.subr.bf16.mxu0 0
    %423 = vmatpush1.bf16.msra.mxu0 0
    %424 = vmatprep.subr.bf16.mxu0 0
    %425 = vmatpush1.bf16.msra.mxu0 0
    %426 = vmatprep.mubr.bf16.mxu0 0
    %427 = vmatmul.mubr.bf16.gmra.mrb[0].mxu0 %v392
    %v428 = vpop.f32.mrb[0].mxu0
    %v429 = vadd.f32 0.0, %v428
    %v430 = vpop.f32.mrb[0].mxu0
    %v431 = vpop.f32.mrb[0].mxu0
    %v432 = vpop.f32.mrb[0].mxu0
    %433 = vdwg.mxu0
    %v435 = vrot.slane %v429, 5
    %v437 = vadd.f32 %v178, %v435
    %v438 = vtanh.pop %v437
    %439 = vst [vmem:[#allocation2] sm:$0x8] %v438
    %v440 = vpack.c.bf16 %v438, %v438
    %v442 = vshrl.u32 %v440, 16
    %v444 = vrot.slane %v442, 1
    %446 = vmatprep.subr.bf16.mxu0 0
    %447 = vmatpush1.bf16.msra.mxu0 %v233
    %448 = vmatprep.subr.bf16.mxu0 0
    %449 = vmatpush1.bf16.msra.mxu0 %v234
    %450 = vmatprep.subr.bf16.mxu0 0
    %451 = vmatpush1.bf16.msra.mxu0 %v235
    %452 = vmatprep.subr.bf16.mxu0 0
    %453 = vmatpush1.bf16.msra.mxu0 %v236
    %454 = vmatprep.subr.bf16.mxu0 0
    %455 = vmatpush1.bf16.msra.mxu0 %v237
    %456 = vmatprep.subr.bf16.mxu0 0
    %457 = vmatpush1.bf16.msra.mxu0 %v238
    %458 = vmatprep.subr.bf16.mxu0 0
    %459 = vmatpush1.bf16.msra.mxu0 %v239
    %460 = vmatprep.subr.bf16.mxu0 0
    %461 = vmatpush1.bf16.msra.mxu0 %v240
    %462 = vmatprep.subr.bf16.mxu0 0
    %463 = vmatpush1.bf16.msra.mxu0 0
    %464 = vmatprep.subr.bf16.mxu0 0
    %465 = vmatpush1.bf16.msra.mxu0 0
    %466 = vmatprep.subr.bf16.mxu0 0
    %467 = vmatpush1.bf16.msra.mxu0 0
    %468 = vmatprep.subr.bf16.mxu0 0
    %469 = vmatpush1.bf16.msra.mxu0 0
    %470 = vmatprep.subr.bf16.mxu0 0
    %471 = vmatpush1.bf16.msra.mxu0 0
    %472 = vmatprep.subr.bf16.mxu0 0
    %473 = vmatpush1.bf16.msra.mxu0 0
    %474 = vmatprep.subr.bf16.mxu0 0
    %475 = vmatpush1.bf16.msra.mxu0 0
    %476 = vmatprep.subr.bf16.mxu0 0
    %477 = vmatpush1.bf16.msra.mxu0 0
    %478 = vmatprep.mubr.bf16.mxu0 0
    %479 = vmatmul.mubr.bf16.gmra.mrb[0].mxu0 %v444
    %v480 = vpop.f32.mrb[0].mxu0
    %v481 = vadd.f32 0.0, %v480
    %v482 = vpop.f32.mrb[0].mxu0
    %v483 = vpop.f32.mrb[0].mxu0
    %v484 = vpop.f32.mrb[0].mxu0
    %485 = vdwg.mxu0
    %v487 = vrot.slane %v481, 4
    %v489 = vadd.f32 %v178, %v487
    %v490 = vtanh.pop %v489
    %491 = vst [vmem:[#allocation2] sm:$0x10] %v490
    %v492 = vld [vmem:[#allocation2] sm:$0xff]
    %v493 = vpack.c.bf16 %v492, %v492
    %v494 = vld [vmem:[#allocation7] sm:$0xf]
    %v495 = vld [vmem:[#allocation7 + $0x4] sm:$0xf]
    %v496 = vld [vmem:[#allocation7 + $0x8] sm:$0xf]
    %v497 = vld [vmem:[#allocation7 + $0xc] sm:$0xf]
    %v498 = vld [vmem:[#allocation7 + $0x10] sm:$0xf]
    %v499 = vld [vmem:[#allocation7 + $0x14] sm:$0xf]
    %v500 = vld [vmem:[#allocation7 + $0x18] sm:$0xf]
    %v501 = vld [vmem:[#allocation7 + $0x1c] sm:$0xf]
    %v502 = vld [vmem:[#allocation7 + $0x20] sm:$0xf]
    %v503 = vld [vmem:[#allocation7 + $0x24] sm:$0xf]
    %v504 = vld [vmem:[#allocation7 + $0x28] sm:$0xf]
    %v505 = vld [vmem:[#allocation7 + $0x2c] sm:$0xf]
    %v506 = vld [vmem:[#allocation7 + $0x30] sm:$0xf]
    %v507 = vld [vmem:[#allocation7 + $0x34] sm:$0xf]
    %v508 = vld [vmem:[#allocation7 + $0x38] sm:$0xf]
    %v509 = vld [vmem:[#allocation7 + $0x3c] sm:$0xf]
    %v510 = vld [vmem:[%s6] sm:$0x1]
    %v512 = vlaneseq
    %v513 = vshrl.u32 %v512, 7
    %v514 = vsub.s32 0, %v513
    %v515 = vrot.slane %v510, %v514
    %v533 = vunpack.c.l.b16 %v494
    %v534 = vunpack.c.l.b16 %v495
    %v535 = vunpack.c.l.b16 %v496
    %v536 = vunpack.c.l.b16 %v497
    %v537 = vunpack.c.l.b16 %v498
    %v538 = vunpack.c.l.b16 %v499
    %v539 = vunpack.c.l.b16 %v500
    %v540 = vunpack.c.l.b16 %v501
    %v541 = vunpack.c.l.b16 %v502
    %v542 = vunpack.c.l.b16 %v503
    %v543 = vunpack.c.l.b16 %v504
    %v544 = vunpack.c.l.b16 %v505
    %v545 = vunpack.c.l.b16 %v506
    %v546 = vunpack.c.l.b16 %v507
    %v547 = vunpack.c.l.b16 %v508
    %v548 = vunpack.c.l.b16 %v509
    %v549 = vpack.c.b16 %v534, %v533
    %v550 = vpack.c.b16 %v536, %v535
    %v551 = vpack.c.b16 %v538, %v537
    %v552 = vpack.c.b16 %v540, %v539
    %v553 = vpack.c.b16 %v542, %v541
    %v554 = vpack.c.b16 %v544, %v543
    %v555 = vpack.c.b16 %v546, %v545
    %v556 = vpack.c.b16 %v548, %v547
    %565 = vmatprep.subr.bf16.mxu0 0
    %566 = vmatpush1.bf16.msra.mxu0 %v549
    %567 = vmatprep.subr.bf16.mxu0 0
    %568 = vmatpush1.bf16.msra.mxu0 %v550
    %569 = vmatprep.subr.bf16.mxu0 0
    %570 = vmatpush1.bf16.msra.mxu0 %v551
    %571 = vmatprep.subr.bf16.mxu0 0
    %572 = vmatpush1.bf16.msra.mxu0 %v552
    %573 = vmatprep.subr.bf16.mxu0 0
    %574 = vmatpush1.bf16.msra.mxu0 %v553
    %575 = vmatprep.subr.bf16.mxu0 0
    %576 = vmatpush1.bf16.msra.mxu0 %v554
    %577 = vmatprep.subr.bf16.mxu0 0
    %578 = vmatpush1.bf16.msra.mxu0 %v555
    %579 = vmatprep.subr.bf16.mxu0 0
    %580 = vmatpush1.bf16.msra.mxu0 %v556
    %581 = vmatprep.subr.bf16.mxu0 0
    %582 = vmatpush1.bf16.msra.mxu0 0
    %583 = vmatprep.subr.bf16.mxu0 0
    %584 = vmatpush1.bf16.msra.mxu0 0
    %585 = vmatprep.subr.bf16.mxu0 0
    %586 = vmatpush1.bf16.msra.mxu0 0
    %587 = vmatprep.subr.bf16.mxu0 0
    %588 = vmatpush1.bf16.msra.mxu0 0
    %589 = vmatprep.subr.bf16.mxu0 0
    %590 = vmatpush1.bf16.msra.mxu0 0
    %591 = vmatprep.subr.bf16.mxu0 0
    %592 = vmatpush1.bf16.msra.mxu0 0
    %593 = vmatprep.subr.bf16.mxu0 0
    %594 = vmatpush1.bf16.msra.mxu0 0
    %595 = vmatprep.subr.bf16.mxu0 0
    %596 = vmatpush1.bf16.msra.mxu0 0
    %597 = vmatprep.mubr.bf16.mxu0 0
    %598 = vmatmul.mubr.bf16.gmra.mrb[0].mxu0 %v493
    %v599 = vpop.f32.mrb[0].mxu0
    %v600 = vadd.f32 %v515, %v599
    %v601 = vpop.f32.mrb[0].mxu0
    %v602 = vpop.f32.mrb[0].mxu0
    %v603 = vpop.f32.mrb[0].mxu0
    %604 = vdwg.mxu0
    %605 = vst [vmem:[%s7] sm:$0xff] %v600
    %606 = vst [vmem:[%s8 - $0x4] sm:$0x10] %v490
    // Predicated region
    $region42: #{char_rnn_forward.1} parent=1 // pred_check
      _
    $region43: #{char_rnn_forward.1} parent=1 // pred_check_branch
      %608 = sbr.rel (0) target = $region45
    $region44: #{char_rnn_forward.1} parent=1 // pred_region
      _
    $region45: #{char_rnn_forward.1} parent=1 // pred_fallthru
      _
    // Predicated region
    $region46: #{char_rnn_forward.1} parent=1 // pred_check
      _
    $region47: #{char_rnn_forward.1} parent=1 // pred_check_branch
      %610 = sbr.rel (0) target = $region49
    $region48: #{char_rnn_forward.1} parent=1 // pred_region
      _
    $region49: #{char_rnn_forward.1} parent=1 // pred_fallthru
      _
    // Predicated region
    $region50: #{char_rnn_forward.1} parent=1 // pred_check
      _
    $region51: #{char_rnn_forward.1} parent=1 // pred_check_branch
      %612 = sbr.rel (0) target = $region53
    $region52: #{char_rnn_forward.1} parent=1 // pred_region
      _
    $region53: #{char_rnn_forward.1} parent=1 // pred_fallthru
      _
    // Predicated region
    $region54: #{char_rnn_forward.1} parent=1 // pred_check
      _
    $region55: #{char_rnn_forward.1} parent=1 // pred_check_branch
      %614 = sbr.rel (0) target = $region57
    $region56: #{char_rnn_forward.1} parent=1 // pred_region
      _
    $region57: #{char_rnn_forward.1} parent=1 // pred_fallthru
      _
    %615 = vsyncpa [#allocation4], 1
    %616 = vsyncpa [#allocation6], 1

</llo_original>
